<compile_context>
chip_gen: v6e
topology: v6e:2x2x1
jax: 0.10.0
libtpu: 0.0.40
codegen_flags: <defaults>
</compile_context>

<pallas_src>
import functools

import jax
import jax.numpy as jnp
from jax import lax
from jax.experimental import pallas as pl
from jax.experimental.pallas import tpu as pltpu

LANES = 128
CHUNK_ROWS = 512                # inner compute chunk: 512*128 elems, ~256 KiB f32 temps
_FALLBACK_BLOCK_ROWS = 8192     # DMA tile (v7x-safe): 8192*128*4 B = 4 MiB / input / buffer


def _default_block_rows():
    """Per-generation DMA tile: larger on 128-MiB-VMEM chips (v5e/v6e), capped so
    v7x (64 MiB physical VMEM) keeps the pipelined-input footprint well under limit."""
    try:
        info = pltpu.get_tpu_info()
        if info.vmem_capacity_bytes > 64 * 1024 * 1024:       # v5e / v6e
            return 16384
    except Exception:
        pass
    return _FALLBACK_BLOCK_ROWS


def _reduce_rows(x):
    """(r, 128) f32 -> (8, 128) f32 partial sums using VPU-only vreg adds when r%8==0."""
    r = x.shape[0]
    if r % 8 == 0:
        return jnp.sum(x.reshape(r // 8, 8, LANES), axis=0)
    # Tiny / odd-sized single-block case (rows < 512 and not a multiple of 8).
    rowsum = jnp.sum(x, axis=0, keepdims=True)                       # (1, 128)
    sub = lax.broadcasted_iota(jnp.int32, (8, LANES), 0)
    return jnp.where(sub == 0, jnp.broadcast_to(rowsum, (8, LANES)), jnp.float32(0.0))


def _dvrl_partials_kernel(e_ref, s_ref, o_ref, *, epsilon, n_valid,
                          s_is_binary, chunk_rows):
    step = pl.program_id(0)
    nsteps = pl.num_programs(0)
    tr = e_ref.shape[0]                      # static block rows
    n_chunks = tr // chunk_rows              # static

    eps = jnp.float32(epsilon)
    half = jnp.float32(0.5)
    one = jnp.float32(1.0)
    zero = jnp.float32(0.0)
    zacc = jnp.zeros((8, LANES), jnp.float32)

    s_is_float = jnp.issubdtype(s_ref.dtype, jnp.floating)

    def chunk_partials(c, carry, masked):
        ll_acc, d_acc, d2_acc = carry
        r0 = c * chunk_rows
        if not isinstance(r0, int):
            r0 = pl.multiple_of(r0, chunk_rows)
        e = e_ref[pl.ds(r0, chunk_rows), :].astype(jnp.float32)
        s_raw = s_ref[pl.ds(r0, chunk_rows), :]

        if s_is_binary:
            # s in {0,1}: select the branch per element -> one EUP log per element.
            sel = (s_raw.astype(jnp.float32) > half) if s_is_float else (s_raw != 0)
            loglik = jnp.log(jnp.where(sel, e + eps, one - e + eps))
        else:
            # General (possibly fractional) s: the two-log form.
            s = s_raw.astype(jnp.float32)
            loglik = s * jnp.log(e + eps) + (one - s) * jnp.log(one - e + eps)

        d = e - half                         # center at 0.5 for f32 accuracy (e in (0,1))
        if masked:
            rid = lax.broadcasted_iota(jnp.int32, (chunk_rows, LANES), 0)
            lid = lax.broadcasted_iota(jnp.int32, (chunk_rows, LANES), 1)
            flat = (step * tr + r0 + rid) * LANES + lid
            valid = flat < n_valid
            loglik = jnp.where(valid, loglik, zero)   # where-select: garbage stays inert
            d = jnp.where(valid, d, zero)             # masked once; d*d inherits the mask

        return (ll_acc + _reduce_rows(loglik),
                d_acc + _reduce_rows(d),
                d2_acc + _reduce_rows(d * d))

    def run(masked):
        init = (zacc, zacc, zacc)
        if n_chunks == 1:
            ll, sd, sd2 = chunk_partials(0, init, masked)
        else:
            ll, sd, sd2 = lax.fori_loop(
                0, n_chunks, lambda c, carry: chunk_partials(c, carry, masked), init)
        o_ref[0] = ll
        o_ref[1] = sd
        o_ref[2] = sd2

    # Interior blocks take the unmasked fast path; only the final grid block can
    # contain the 128-lane tail pad / ragged-block garbage and pays for masking.
    @pl.when(step != nsteps - 1)
    def _fast():
        run(False)

    @pl.when(step == nsteps - 1)
    def _masked():
        run(True)


def dvrl_loss(est_data_value, s_input, reward_input, *, epsilon, threshold,
              std_penalty_weight=None, s_is_binary=True, block_rows=None):
    """Pallas implementation of DvrlLoss.forward.  Returns shape (1,) float32."""
    e_flat = jnp.reshape(est_data_value, (-1,))      # keep native dtypes
    s_flat = jnp.reshape(s_input, (-1,))
    n = int(e_flat.shape[0])

    rows = pl.cdiv(n, LANES)
    padded = rows * LANES
    if padded != n:
        # Only the <128-element ragged tail is ever padded in the wrapper;
        # those elements are masked in-kernel by the flat-index validity test.
        e_flat = jnp.pad(e_flat, (0, padded - n))
        s_flat = jnp.pad(s_flat, (0, padded - n))
    e2d = e_flat.reshape(rows, LANES)
    s2d = s_flat.reshape(rows, LANES)

    if block_rows is None:
        block_rows = _default_block_rows()

    if rows <= CHUNK_ROWS:
        chunk = rows                     # single chunk, single full-extent block
        tr = rows
    else:
        chunk = CHUNK_ROWS
        block_rows = max(chunk, (block_rows // chunk) * chunk)
        tr = min(block_rows, (rows // chunk) * chunk)
    nsteps = pl.cdiv(rows, tr)

    kernel = functools.partial(
        _dvrl_partials_kernel,
        epsilon=float(epsilon),
        n_valid=n,
        s_is_binary=bool(s_is_binary),
        chunk_rows=chunk,
    )

    # VMEM budget: double-buffered inputs + ~16 MiB headroom for chunk temps/output.
    in_bytes = 2 * tr * LANES * (e2d.dtype.itemsize + s2d.dtype.itemsize)
    vmem_limit = int(min(max(40 << 20, in_bytes + (16 << 20)), 100 << 20))

    n_logs = n if s_is_binary else 2 * n
    cost = pl.CostEstimate(
        flops=10 * n,
        transcendentals=n_logs,
        bytes_accessed=int(n * (e2d.dtype.itemsize + s2d.dtype.itemsize))
        + int(nsteps) * 3 * 8 * LANES * 4,
    )

    partials = pl.pallas_call(
        kernel,
        out_shape=jax.ShapeDtypeStruct((nsteps, 3, 8, LANES), jnp.float32),
        grid=(nsteps,),
        in_specs=[
            pl.BlockSpec((tr, LANES), lambda i: (i, 0)),      # est_data_value
            pl.BlockSpec((tr, LANES), lambda i: (i, 0)),      # s_input
        ],
        out_specs=pl.BlockSpec((None, 3, 8, LANES), lambda i: (i, 0, 0, 0)),
        compiler_params=pltpu.CompilerParams(
            dimension_semantics=("parallel",),                # engages both v7x TCs
            vmem_limit_bytes=vmem_limit,
        ),
        cost_estimate=cost,
    )(e2d, s2d)

    # O(nsteps) epilogue in plain JAX: final cross-lane/block reduce + hinge/variance.
    sums = jnp.sum(partials, axis=(0, 2, 3))                  # (3,) f32
    prob, sum_d, sum_d2 = sums[0], sums[1], sums[2]
    reward = jnp.reshape(reward_input, ()).astype(jnp.float32)

    mean_d = sum_d * jnp.float32(1.0 / n)
    mean_e = mean_d + jnp.float32(0.5)
    zero = jnp.float32(0.0)
    loss = (-reward * prob
            + jnp.float32(1000.0) * jnp.maximum(mean_e - jnp.float32(threshold), zero)
            + jnp.float32(1000.0)
            * jnp.maximum(jnp.float32(1.0 - threshold) - mean_e, zero))
    if std_penalty_weight is not None:
        # torch.var default: unbiased (divide by N-1).  n==1 is clamped
        # (torch would return NaN for that degenerate case).
        denom = jnp.float32(1.0 / max(n - 1, 1))
        var = (sum_d2 - jnp.float32(n) * mean_d * mean_d) * denom
        loss = loss - jnp.float32(std_penalty_weight) * var
    return jnp.reshape(loss, (1,))


def dvrl_loss_ref(est_data_value, s_input, reward_input, *,
                  epsilon, threshold, std_penalty_weight=None):
    """Pure-JAX reference mirroring the PyTorch module."""
    e = est_data_value.astype(jnp.float32)
    s = s_input.astype(jnp.float32)
    one = jnp.ones_like(e)
    prob = jnp.sum(s * jnp.log(e + epsilon) + (one - s) * jnp.log(one - e + epsilon))
    zero = jnp.zeros((1,), jnp.float32)
    loss = (-reward_input * prob
            + 1000.0 * jnp.maximum(jnp.mean(e) - threshold, zero)
            + 1000.0 * jnp.maximum(1.0 - threshold - jnp.mean(e), zero))
    if std_penalty_weight is not None:
        var = jnp.var(e, ddof=1)
        loss = loss - std_penalty_weight * var
    return loss


if __name__ == "__main__":
    key = jax.random.PRNGKey(0)
    k1, k2, k3, k4, k5, k6, k7 = jax.random.split(key, 7)

    epsilon = 1e-8
    threshold = 0.9
    std_penalty_weight = 0.1
    reward_input = jax.random.normal(k3, (), jnp.float32)

    # --- Test 1: canonical DVRL shape (batch, 1), binary selection, std penalty,
    #             single block / single chunk ---------------------------------
    N1 = 256
    e1 = jax.random.uniform(k1, (N1, 1), jnp.float32, minval=0.01, maxval=0.99)
    s1 = (jax.random.uniform(k2, (N1, 1), jnp.float32) > 0.5).astype(jnp.float32)
    out1 = jax.block_until_ready(
        dvrl_loss(e1, s1, reward_input, epsilon=epsilon, threshold=threshold,
                  std_penalty_weight=std_penalty_weight))
    ref1 = dvrl_loss_ref(e1, s1, reward_input, epsilon=epsilon, threshold=threshold,
                         std_penalty_weight=std_penalty_weight)
    assert out1.shape == (1,)
    assert jnp.allclose(out1, ref1, rtol=1e-4, atol=1e-3), (out1, ref1)

    # --- Test 2: ragged N, fractional s (general two-log path), no std penalty,
    #             multi-block grid (unmasked interior block + masked ragged last) --
    N2 = 70000      # rows = 547 -> tr = 512, grid = 2, ragged masked last block
    e2 = jax.random.uniform(k4, (N2,), jnp.float32, minval=0.01, maxval=0.99)
    s2 = jax.random.uniform(k5, (N2,), jnp.float32)
    out2 = jax.block_until_ready(
        dvrl_loss(e2, s2, reward_input, epsilon=epsilon, threshold=threshold,
                  std_penalty_weight=None, s_is_binary=False))
    ref2 = dvrl_loss_ref(e2, s2, reward_input, epsilon=epsilon, threshold=threshold,
                         std_penalty_weight=None)
    assert out2.shape == (1,)
    assert jnp.allclose(out2, ref2, rtol=1e-3, atol=1e-2), (out2, ref2)

    # --- Test 3: small ragged N exercising the odd (rows % 8 != 0) reduce path --
    N3 = 1230       # rows = 10 -> single block, odd-sized chunk, tail-pad mask
    e3 = jax.random.uniform(k6, (N3,), jnp.float32, minval=0.01, maxval=0.99)
    s3 = (jax.random.uniform(k7, (N3,), jnp.float32) > 0.5).astype(jnp.float32)
    out3 = jax.block_until_ready(
        dvrl_loss(e3, s3, reward_input, epsilon=epsilon, threshold=threshold,
                  std_penalty_weight=std_penalty_weight))
    ref3 = dvrl_loss_ref(e3, s3, reward_input, epsilon=epsilon, threshold=threshold,
                         std_penalty_weight=std_penalty_weight)
    assert out3.shape == (1,)
    assert jnp.allclose(out3, ref3, rtol=1e-4, atol=1e-3), (out3, ref3)

    print("KERNEL_OK")
</pallas_src>

<mosaic_0001>
module attributes {stable_mosaic.version = 11 : i64} {
  func.func @_dvrl_partials_kernel(%arg0: i32, %arg1: memref<2x128xf32, #tpu.memory_space<vmem>>, %arg2: memref<2x128xf32, #tpu.memory_space<vmem>>, %arg3: memref<1x3x8x128xf32, #tpu.memory_space<vmem>>) attributes {dimension_semantics = [#tpu.dimension_semantics<parallel>], iteration_bounds = array<i64: 1>, scalar_prefetch = 0 : i64, scratch_operands = 0 : i64, tpu.core_type = #tpu.core_type<tc>, window_params = [{transform_indices = @transform_0, window_bounds = array<i64: 2, 128>}, {transform_indices = @transform_1, window_bounds = array<i64: 2, 128>}, {transform_indices = @transform_2, window_bounds = array<i64: 1, 3, 8, 128>}]} {
    %cst = arith.constant 0.000000e+00 : f32
    %0 = vector.broadcast %cst : f32 to vector<8x128xf32>
    %c0_i32 = arith.constant 0 : i32
    %1 = arith.cmpi ne, %arg0, %c0_i32 : i32
    %2 = arith.extui %1 : i1 to i32
    %cst_0 = arith.constant 5.000000e-01 : f32
    %cst_1 = arith.constant 9.99999993E-9 : f32
    %cst_2 = arith.constant 1.000000e+00 : f32
    %c0_i32_3 = arith.constant 0 : i32
    %3 = arith.cmpi ne, %2, %c0_i32_3 : i32
    scf.if %3 {
      %c0 = arith.constant 0 : index
      %c0_10 = arith.constant 0 : index
      %7 = vector.load %arg1[%c0, %c0_10] : memref<2x128xf32, #tpu.memory_space<vmem>>, vector<2x128xf32>
      %c0_11 = arith.constant 0 : index
      %c0_12 = arith.constant 0 : index
      %8 = vector.load %arg2[%c0_11, %c0_12] : memref<2x128xf32, #tpu.memory_space<vmem>>, vector<2x128xf32>
      %9 = vector.broadcast %cst_0 : f32 to vector<2x128xf32>
      %10 = arith.cmpf ogt, %8, %9 : vector<2x128xf32>
      %11 = vector.broadcast %cst_1 : f32 to vector<2x128xf32>
      %12 = arith.addf %7, %11 : vector<2x128xf32>
      %13 = vector.broadcast %cst_2 : f32 to vector<2x128xf32>
      %14 = arith.subf %13, %7 : vector<2x128xf32>
      %15 = vector.broadcast %cst_1 : f32 to vector<2x128xf32>
      %16 = arith.addf %14, %15 : vector<2x128xf32>
      %17 = arith.select %10, %12, %16 : vector<2x128xi1>, vector<2x128xf32>
      %18 = math.log %17 : vector<2x128xf32>
      %19 = vector.broadcast %cst_0 : f32 to vector<2x128xf32>
      %20 = arith.subf %7, %19 : vector<2x128xf32>
      %cst_13 = arith.constant dense<0.000000e+00> : vector<128xf32>
      %21 = vector.multi_reduction <add>, %18, %cst_13 [0] : vector<2x128xf32> to vector<128xf32>
      %22 = vector.shape_cast %21 : vector<128xf32> to vector<1x128xf32>
      %23 = tpu.iota {dimensions = array<i32: 0>} : vector<8x128xi32>
      %c0_i32_14 = arith.constant 0 : i32
      %24 = vector.broadcast %c0_i32_14 : i32 to vector<8x128xi32>
      %25 = arith.cmpi eq, %23, %24 : vector<8x128xi32>
      %26 = vector.shape_cast %22 : vector<1x128xf32> to vector<1x128xf32>
      %27 = vector.broadcast %26 : vector<1x128xf32> to vector<8x128xf32>
      %cst_15 = arith.constant 0.000000e+00 : f32
      %28 = vector.broadcast %cst_15 : f32 to vector<8x128xf32>
      %29 = arith.select %25, %27, %28 : vector<8x128xi1>, vector<8x128xf32>
      %30 = arith.addf %0, %29 : vector<8x128xf32>
      %cst_16 = arith.constant dense<0.000000e+00> : vector<128xf32>
      %31 = vector.multi_reduction <add>, %20, %cst_16 [0] : vector<2x128xf32> to vector<128xf32>
      %32 = vector.shape_cast %31 : vector<128xf32> to vector<1x128xf32>
      %33 = tpu.iota {dimensions = array<i32: 0>} : vector<8x128xi32>
      %c0_i32_17 = arith.constant 0 : i32
      %34 = vector.broadcast %c0_i32_17 : i32 to vector<8x128xi32>
      %35 = arith.cmpi eq, %33, %34 : vector<8x128xi32>
      %36 = vector.shape_cast %32 : vector<1x128xf32> to vector<1x128xf32>
      %37 = vector.broadcast %36 : vector<1x128xf32> to vector<8x128xf32>
      %cst_18 = arith.constant 0.000000e+00 : f32
      %38 = vector.broadcast %cst_18 : f32 to vector<8x128xf32>
      %39 = arith.select %35, %37, %38 : vector<8x128xi1>, vector<8x128xf32>
      %40 = arith.addf %0, %39 : vector<8x128xf32>
      %41 = arith.mulf %20, %20 : vector<2x128xf32>
      %cst_19 = arith.constant dense<0.000000e+00> : vector<128xf32>
      %42 = vector.multi_reduction <add>, %41, %cst_19 [0] : vector<2x128xf32> to vector<128xf32>
      %43 = vector.shape_cast %42 : vector<128xf32> to vector<1x128xf32>
      %44 = tpu.iota {dimensions = array<i32: 0>} : vector<8x128xi32>
      %c0_i32_20 = arith.constant 0 : i32
      %45 = vector.broadcast %c0_i32_20 : i32 to vector<8x128xi32>
      %46 = arith.cmpi eq, %44, %45 : vector<8x128xi32>
      %47 = vector.shape_cast %43 : vector<1x128xf32> to vector<1x128xf32>
      %48 = vector.broadcast %47 : vector<1x128xf32> to vector<8x128xf32>
      %cst_21 = arith.constant 0.000000e+00 : f32
      %49 = vector.broadcast %cst_21 : f32 to vector<8x128xf32>
      %50 = arith.select %46, %48, %49 : vector<8x128xi1>, vector<8x128xf32>
      %51 = arith.addf %0, %50 : vector<8x128xf32>
      %c0_22 = arith.constant 0 : index
      %c0_23 = arith.constant 0 : index
      %c0_24 = arith.constant 0 : index
      %c0_25 = arith.constant 0 : index
      %52 = vector.load %arg3[%c0_22, %c0_23, %c0_24, %c0_25] : memref<1x3x8x128xf32, #tpu.memory_space<vmem>>, vector<1x1x8x128xf32>
      %53 = vector.shape_cast %52 : vector<1x1x8x128xf32> to vector<8x128xf32>
      %54 = vector.shape_cast %30 : vector<8x128xf32> to vector<1x1x8x128xf32>
      tpu.vector_store %arg3[%c0_22, %c0_23, %c0_24, %c0_25], %54 {strides = array<i32>} : memref<1x3x8x128xf32, #tpu.memory_space<vmem>>, vector<1x1x8x128xf32>,
      %c0_26 = arith.constant 0 : index
      %c1 = arith.constant 1 : index
      %c0_27 = arith.constant 0 : index
      %c0_28 = arith.constant 0 : index
      %55 = vector.load %arg3[%c0_26, %c1, %c0_27, %c0_28] : memref<1x3x8x128xf32, #tpu.memory_space<vmem>>, vector<1x1x8x128xf32>
      %56 = vector.shape_cast %55 : vector<1x1x8x128xf32> to vector<8x128xf32>
      %57 = vector.shape_cast %40 : vector<8x128xf32> to vector<1x1x8x128xf32>
      tpu.vector_store %arg3[%c0_26, %c1, %c0_27, %c0_28], %57 {strides = array<i32>} : memref<1x3x8x128xf32, #tpu.memory_space<vmem>>, vector<1x1x8x128xf32>,
      %c0_29 = arith.constant 0 : index
      %c2 = arith.constant 2 : index
      %c0_30 = arith.constant 0 : index
      %c0_31 = arith.constant 0 : index
      %58 = vector.load %arg3[%c0_29, %c2, %c0_30, %c0_31] : memref<1x3x8x128xf32, #tpu.memory_space<vmem>>, vector<1x1x8x128xf32>
      %59 = vector.shape_cast %58 : vector<1x1x8x128xf32> to vector<8x128xf32>
      %60 = vector.shape_cast %51 : vector<8x128xf32> to vector<1x1x8x128xf32>
      tpu.vector_store %arg3[%c0_29, %c2, %c0_30, %c0_31], %60 {strides = array<i32>} : memref<1x3x8x128xf32, #tpu.memory_space<vmem>>, vector<1x1x8x128xf32>,
    } else {
    }
    %c0_i32_4 = arith.constant 0 : i32
    %4 = arith.cmpi eq, %arg0, %c0_i32_4 : i32
    %5 = arith.extui %4 : i1 to i32
    %cst_5 = arith.constant 5.000000e-01 : f32
    %cst_6 = arith.constant 9.99999993E-9 : f32
    %cst_7 = arith.constant 1.000000e+00 : f32
    %cst_8 = arith.constant 0.000000e+00 : f32
    %c0_i32_9 = arith.constant 0 : i32
    %6 = arith.cmpi ne, %5, %c0_i32_9 : i32
    scf.if %6 {
      %c0 = arith.constant 0 : index
      %c0_10 = arith.constant 0 : index
      %7 = vector.load %arg1[%c0, %c0_10] : memref<2x128xf32, #tpu.memory_space<vmem>>, vector<2x128xf32>
      %c0_11 = arith.constant 0 : index
      %c0_12 = arith.constant 0 : index
      %8 = vector.load %arg2[%c0_11, %c0_12] : memref<2x128xf32, #tpu.memory_space<vmem>>, vector<2x128xf32>
      %9 = vector.broadcast %cst_5 : f32 to vector<2x128xf32>
      %10 = arith.cmpf ogt, %8, %9 : vector<2x128xf32>
      %11 = vector.broadcast %cst_6 : f32 to vector<2x128xf32>
      %12 = arith.addf %7, %11 : vector<2x128xf32>
      %13 = vector.broadcast %cst_7 : f32 to vector<2x128xf32>
      %14 = arith.subf %13, %7 : vector<2x128xf32>
      %15 = vector.broadcast %cst_6 : f32 to vector<2x128xf32>
      %16 = arith.addf %14, %15 : vector<2x128xf32>
      %17 = arith.select %10, %12, %16 : vector<2x128xi1>, vector<2x128xf32>
      %18 = math.log %17 : vector<2x128xf32>
      %19 = vector.broadcast %cst_5 : f32 to vector<2x128xf32>
      %20 = arith.subf %7, %19 : vector<2x128xf32>
      %21 = tpu.iota {dimensions = array<i32: 0>} : vector<2x128xi32>
      %22 = tpu.iota {dimensions = array<i32: 1>} : vector<2x128xi32>
      %c2_i32 = arith.constant 2 : i32
      %23 = arith.muli %arg0, %c2_i32 : i32
      %c0_i32_13 = arith.constant 0 : i32
      %24 = arith.addi %23, %c0_i32_13 : i32
      %25 = vector.broadcast %24 : i32 to vector<2x128xi32>
      %26 = arith.addi %25, %21 : vector<2x128xi32>
      %c128_i32 = arith.constant 128 : i32
      %27 = vector.broadcast %c128_i32 : i32 to vector<2x128xi32>
      %28 = arith.muli %26, %27 : vector<2x128xi32>
      %29 = arith.addi %28, %22 : vector<2x128xi32>
      %c256_i32 = arith.constant 256 : i32
      %30 = vector.broadcast %c256_i32 : i32 to vector<2x128xi32>
      %31 = arith.cmpi slt, %29, %30 : vector<2x128xi32>
      %32 = vector.broadcast %cst_8 : f32 to vector<2x128xf32>
      %33 = arith.select %31, %18, %32 : vector<2x128xi1>, vector<2x128xf32>
      %34 = vector.broadcast %cst_8 : f32 to vector<2x128xf32>
      %35 = arith.select %31, %20, %34 : vector<2x128xi1>, vector<2x128xf32>
      %cst_14 = arith.constant dense<0.000000e+00> : vector<128xf32>
      %36 = vector.multi_reduction <add>, %33, %cst_14 [0] : vector<2x128xf32> to vector<128xf32>
      %37 = vector.shape_cast %36 : vector<128xf32> to vector<1x128xf32>
      %38 = tpu.iota {dimensions = array<i32: 0>} : vector<8x128xi32>
      %c0_i32_15 = arith.constant 0 : i32
      %39 = vector.broadcast %c0_i32_15 : i32 to vector<8x128xi32>
      %40 = arith.cmpi eq, %38, %39 : vector<8x128xi32>
      %41 = vector.shape_cast %37 : vector<1x128xf32> to vector<1x128xf32>
      %42 = vector.broadcast %41 : vector<1x128xf32> to vector<8x128xf32>
      %cst_16 = arith.constant 0.000000e+00 : f32
      %43 = vector.broadcast %cst_16 : f32 to vector<8x128xf32>
      %44 = arith.select %40, %42, %43 : vector<8x128xi1>, vector<8x128xf32>
      %45 = arith.addf %0, %44 : vector<8x128xf32>
      %cst_17 = arith.constant dense<0.000000e+00> : vector<128xf32>
      %46 = vector.multi_reduction <add>, %35, %cst_17 [0] : vector<2x128xf32> to vector<128xf32>
      %47 = vector.shape_cast %46 : vector<128xf32> to vector<1x128xf32>
      %48 = tpu.iota {dimensions = array<i32: 0>} : vector<8x128xi32>
      %c0_i32_18 = arith.constant 0 : i32
      %49 = vector.broadcast %c0_i32_18 : i32 to vector<8x128xi32>
      %50 = arith.cmpi eq, %48, %49 : vector<8x128xi32>
      %51 = vector.shape_cast %47 : vector<1x128xf32> to vector<1x128xf32>
      %52 = vector.broadcast %51 : vector<1x128xf32> to vector<8x128xf32>
      %cst_19 = arith.constant 0.000000e+00 : f32
      %53 = vector.broadcast %cst_19 : f32 to vector<8x128xf32>
      %54 = arith.select %50, %52, %53 : vector<8x128xi1>, vector<8x128xf32>
      %55 = arith.addf %0, %54 : vector<8x128xf32>
      %56 = arith.mulf %35, %35 : vector<2x128xf32>
      %cst_20 = arith.constant dense<0.000000e+00> : vector<128xf32>
      %57 = vector.multi_reduction <add>, %56, %cst_20 [0] : vector<2x128xf32> to vector<128xf32>
      %58 = vector.shape_cast %57 : vector<128xf32> to vector<1x128xf32>
      %59 = tpu.iota {dimensions = array<i32: 0>} : vector<8x128xi32>
      %c0_i32_21 = arith.constant 0 : i32
      %60 = vector.broadcast %c0_i32_21 : i32 to vector<8x128xi32>
      %61 = arith.cmpi eq, %59, %60 : vector<8x128xi32>
      %62 = vector.shape_cast %58 : vector<1x128xf32> to vector<1x128xf32>
      %63 = vector.broadcast %62 : vector<1x128xf32> to vector<8x128xf32>
      %cst_22 = arith.constant 0.000000e+00 : f32
      %64 = vector.broadcast %cst_22 : f32 to vector<8x128xf32>
      %65 = arith.select %61, %63, %64 : vector<8x128xi1>, vector<8x128xf32>
      %66 = arith.addf %0, %65 : vector<8x128xf32>
      %c0_23 = arith.constant 0 : index
      %c0_24 = arith.constant 0 : index
      %c0_25 = arith.constant 0 : index
      %c0_26 = arith.constant 0 : index
      %67 = vector.load %arg3[%c0_23, %c0_24, %c0_25, %c0_26] : memref<1x3x8x128xf32, #tpu.memory_space<vmem>>, vector<1x1x8x128xf32>
      %68 = vector.shape_cast %67 : vector<1x1x8x128xf32> to vector<8x128xf32>
      %69 = vector.shape_cast %45 : vector<8x128xf32> to vector<1x1x8x128xf32>
      tpu.vector_store %arg3[%c0_23, %c0_24, %c0_25, %c0_26], %69 {strides = array<i32>} : memref<1x3x8x128xf32, #tpu.memory_space<vmem>>, vector<1x1x8x128xf32>,
      %c0_27 = arith.constant 0 : index
      %c1 = arith.constant 1 : index
      %c0_28 = arith.constant 0 : index
      %c0_29 = arith.constant 0 : index
      %70 = vector.load %arg3[%c0_27, %c1, %c0_28, %c0_29] : memref<1x3x8x128xf32, #tpu.memory_space<vmem>>, vector<1x1x8x128xf32>
      %71 = vector.shape_cast %70 : vector<1x1x8x128xf32> to vector<8x128xf32>
      %72 = vector.shape_cast %55 : vector<8x128xf32> to vector<1x1x8x128xf32>
      tpu.vector_store %arg3[%c0_27, %c1, %c0_28, %c0_29], %72 {strides = array<i32>} : memref<1x3x8x128xf32, #tpu.memory_space<vmem>>, vector<1x1x8x128xf32>,
      %c0_30 = arith.constant 0 : index
      %c2 = arith.constant 2 : index
      %c0_31 = arith.constant 0 : index
      %c0_32 = arith.constant 0 : index
      %73 = vector.load %arg3[%c0_30, %c2, %c0_31, %c0_32] : memref<1x3x8x128xf32, #tpu.memory_space<vmem>>, vector<1x1x8x128xf32>
      %74 = vector.shape_cast %73 : vector<1x1x8x128xf32> to vector<8x128xf32>
      %75 = vector.shape_cast %66 : vector<8x128xf32> to vector<1x1x8x128xf32>
      tpu.vector_store %arg3[%c0_30, %c2, %c0_31, %c0_32], %75 {strides = array<i32>} : memref<1x3x8x128xf32, #tpu.memory_space<vmem>>, vector<1x1x8x128xf32>,
    } else {
    }
    return
  }
  func.func @transform_0(%arg0: i32) -> (i32, i32) {
    %c0_i32 = arith.constant 0 : i32
    %c0_i32_0 = arith.constant 0 : i32
    return %arg0, %c0_i32 : i32, i32
  }
  func.func @transform_1(%arg0: i32) -> (i32, i32) {
    %c0_i32 = arith.constant 0 : i32
    %c0_i32_0 = arith.constant 0 : i32
    return %arg0, %c0_i32 : i32, i32
  }
  func.func @transform_2(%arg0: i32) -> (i32, i32, i32, i32) {
    %c0_i32 = arith.constant 0 : i32
    %c0_i32_0 = arith.constant 0 : i32
    %c0_i32_1 = arith.constant 0 : i32
    %c0_i32_2 = arith.constant 0 : i32
    return %arg0, %c0_i32, %c0_i32_0, %c0_i32_1 : i32, i32, i32, i32
  }
}

</mosaic_0001>

<llo_original>
// kernel: tpu_custom_call.1
$region0: #{tpu_custom_call.1}
  #allocation0 [shape = 'u32[]', space=smem, size = 0x4, offset = 0x4, fixed_abs, tag = 'smem constant byte address 0x4 - core index']
  #allocation1 [shape = 'u32[144,128]{1,0:T(1,128)}', space=vmem, size = 0x12000, scoped, tag = 'internal scratch']
  %s0 = inlined_call_operand.hbm [shape: f32[2,128], index: 0, kind: input, shape index: {}]
  %s1 = inlined_call_operand.hbm [shape: f32[2,128], index: 1, kind: input, shape index: {}]
  %s2 = inlined_call_operand.hbm [shape: f32[1,3,8,128], index: 2, kind: output, shape index: {}]
  %s3 = sld [smem:[#allocation0]]
  $region34: #{tpu_custom_call.1} parent=0
    _
  %s5 = ssub.s32 1, %s3
  %s6 = scalar_select 0, %s5, %s3
  $region1: #{tpu_custom_call.1} parent=0
    #allocation2 [shape = 'u8[1024]{0}', space=vmem, size = 0x400, scoped, tag = 'input window, operand 0, single buffered']
    #allocation3 [shape = 's32[1]{0}', space=sflag, size = 0x4, scoped, tag = 'scoped memory for tpu_custom_call.1']
    #allocation4 [shape = 's32[1]{0}', space=sflag, size = 0x4, scoped, tag = 'scoped memory for tpu_custom_call.1']
    #allocation5 [shape = 'u8[1024]{0}', space=vmem, size = 0x400, scoped, tag = 'input window, operand 1, single buffered']
    #allocation6 [shape = 's32[1]{0}', space=sflag, size = 0x4, scoped, tag = 'scoped memory for tpu_custom_call.1']
    #allocation7 [shape = 'u8[12288]{0}', space=vmem, size = 0x3000, scoped, tag = 'output window, operand 0, single buffered']
    %7 = vsyncpa [#allocation3], 0
    %8 = vsyncpa [#allocation6], 0
    %9 = vsyncpa [#allocation4], 0
    // Predicated region
    $region2: #{tpu_custom_call.1} parent=1 // pred_check
      _
    $region3: #{tpu_custom_call.1} parent=1 // pred_check_branch
      %11 = sbr.rel (0) target = $region5
    $region4: #{tpu_custom_call.1} parent=1 // pred_region
      %s13 = ssub.s32 32, 32
      %14 = vsyncadd [#allocation3], %s13
      %s16 = sshll.u32 [#allocation2], 4
      %s17 = int_to_ptr.vmem [resolvable:$true] %s16
      %19 = dma.hbm_to_vmem [thread:$0]  %s0, 32, %s17, [#allocation3]
    $region5: #{tpu_custom_call.1} parent=1 // pred_fallthru
      _
    // Predicated region
    $region6: #{tpu_custom_call.1} parent=1 // pred_check
      _
    $region7: #{tpu_custom_call.1} parent=1 // pred_check_branch
      %21 = sbr.rel (0) target = $region9
    $region8: #{tpu_custom_call.1} parent=1 // pred_region
      %s23 = ssub.s32 32, 32
      %24 = vsyncadd [#allocation6], %s23
      %s26 = sshll.u32 [#allocation5], 4
      %s27 = int_to_ptr.vmem [resolvable:$true] %s26
      %29 = dma.hbm_to_vmem [thread:$0]  %s1, 32, %s27, [#allocation6]
    $region9: #{tpu_custom_call.1} parent=1 // pred_fallthru
      _
    // Predicated region
    $region10: #{tpu_custom_call.1} parent=1 // pred_check
      _
    $region11: #{tpu_custom_call.1} parent=1 // pred_check_branch
      %31 = sbr.rel (0) target = $region13
    $region12: #{tpu_custom_call.1} parent=1 // pred_region
      %32 = dma.done [#allocation3], 32
    $region13: #{tpu_custom_call.1} parent=1 // pred_fallthru
      _
    // Predicated region
    $region14: #{tpu_custom_call.1} parent=1 // pred_check
      _
    $region15: #{tpu_custom_call.1} parent=1 // pred_check_branch
      %34 = sbr.rel (0) target = $region17
    $region16: #{tpu_custom_call.1} parent=1 // pred_region
      %35 = dma.done [#allocation6], 32
    $region17: #{tpu_custom_call.1} parent=1 // pred_fallthru
      _
    %p36 = scmp.ne.s32.totalorder 0, 0
    // Predicated region
    $region18: #{tpu_custom_call.1} parent=1 // pred_check
      %p37 = pneg %p36
    $region19: #{tpu_custom_call.1} parent=1 // pred_check_branch
      %39 = sbr.rel (%p37) target = $region21
    $region20: #{tpu_custom_call.1} parent=1 // pred_region
      %v40 = vld [vmem:[#allocation2] sm:$0x3]
      %v41 = vld [vmem:[#allocation5] sm:$0x3]
      %vm42 = vcmp.gt.f32.partialorder %v41, 0.5
      %v43 = vadd.f32 %v40, 1e-08
      %v44 = vsub.f32 1.0, %v40
      %v45 = vadd.f32 %v44, 1e-08
      %v46 = vsel %vm42, %v43, %v45
      %v47 = vlog2.pop %v46
      %v48 = vmul.f32 %v47, 0.6931472
      %v49 = vsub.f32 %v40, 0.5
      %vm50 = vcmask 1041408
      %v51 = vsel %vm50, %v48, 0.0
      %v52 = vrot.slane %v51, 4
      %v53 = vadd.f32 %v51, %v52
      %v54 = vrot.slane %v53, 2
      %v55 = vadd.f32 %v53, %v54
      %v56 = vrot.slane %v55, 1
      %v57 = vadd.f32 %v55, %v56
      %v58 = vlaneseq
      %v59 = vshrl.u32 %v58, 7
      %vm60 = vcmp.eq.s32.totalorder %v59, 0
      %v61 = vsel %vm60, %v57, 0.0
      %v62 = vadd.f32 %v61, 0.0
      %v63 = vsel %vm50, %v49, 0.0
      %v64 = vrot.slane %v63, 4
      %v65 = vadd.f32 %v63, %v64
      %v66 = vrot.slane %v65, 2
      %v67 = vadd.f32 %v65, %v66
      %v68 = vrot.slane %v67, 1
      %v69 = vadd.f32 %v67, %v68
      %v70 = vsel %vm60, %v69, 0.0
      %v71 = vadd.f32 %v70, 0.0
      %v72 = vmul.f32 %v49, %v49
      %v73 = vsel %vm50, %v72, 0.0
      %v74 = vrot.slane %v73, 4
      %v75 = vadd.f32 %v73, %v74
      %v76 = vrot.slane %v75, 2
      %v77 = vadd.f32 %v75, %v76
      %v78 = vrot.slane %v77, 1
      %v79 = vadd.f32 %v77, %v78
      %v80 = vsel %vm60, %v79, 0.0
      %v81 = vadd.f32 %v80, 0.0
      %82 = vst [vmem:[#allocation7] sm:$0xff] %v62
      %s83 = scalar_lea.vmem [#allocation7], 8
      %84 = vst [vmem:[%s83] sm:$0xff] %v71
      %s85 = scalar_lea.vmem [#allocation7], 16
      %86 = vst [vmem:[%s85] sm:$0xff] %v81
    $region21: #{tpu_custom_call.1} parent=1 // pred_fallthru
      _
    %p87 = scmp.eq.s32.totalorder 0, 0
    // Predicated region
    $region22: #{tpu_custom_call.1} parent=1 // pred_check
      %p88 = pneg %p87
    $region23: #{tpu_custom_call.1} parent=1 // pred_check_branch
      %90 = sbr.rel (%p88) target = $region25
    $region24: #{tpu_custom_call.1} parent=1 // pred_region
      %v91 = vld [vmem:[#allocation2] sm:$0x3]
      %v92 = vld [vmem:[#allocation5] sm:$0x3]
      %vm93 = vcmp.gt.f32.partialorder %v92, 0.5
      %v94 = vadd.f32 %v91, 1e-08
      %v95 = vsub.f32 1.0, %v91
      %v96 = vadd.f32 %v95, 1e-08
      %v97 = vsel %vm93, %v94, %v96
      %v98 = vlog2.pop %v97
      %v99 = vmul.f32 %v98, 0.6931472
      %v100 = vsub.f32 %v91, 0.5
      %v101 = vlaneseq
      %v102 = vshrl.u32 %v101, 7
      %v103 = vlaneseq
      %v104 = vand.u32 %v103, 127
      %s105 = smul.u32 0, 2
      %v106 = vstv %s105
      %v107 = vadd.s32 %v106, %v102
      %v108 = vmul.u32 %v107, 128
      %v109 = vadd.s32 %v108, %v104
      %vm110 = vcmp.lt.s32.totalorder %v109, 256
      %v111 = vsel %vm110, %v99, 0.0
      %v112 = vsel %vm110, %v100, 0.0
      %vm113 = vcmask 1041408
      %v114 = vsel %vm113, %v111, 0.0
      %v115 = vrot.slane %v114, 4
      %v116 = vadd.f32 %v114, %v115
      %v117 = vrot.slane %v116, 2
      %v118 = vadd.f32 %v116, %v117
      %v119 = vrot.slane %v118, 1
      %v120 = vadd.f32 %v118, %v119
      %vm121 = vcmp.eq.s32.totalorder %v102, 0
      %v122 = vsel %vm121, %v120, 0.0
      %v123 = vadd.f32 %v122, 0.0
      %v124 = vsel %vm113, %v112, 0.0
      %v125 = vrot.slane %v124, 4
      %v126 = vadd.f32 %v124, %v125
      %v127 = vrot.slane %v126, 2
      %v128 = vadd.f32 %v126, %v127
      %v129 = vrot.slane %v128, 1
      %v130 = vadd.f32 %v128, %v129
      %v131 = vsel %vm121, %v130, 0.0
      %v132 = vadd.f32 %v131, 0.0
      %v133 = vmul.f32 %v112, %v112
      %v134 = vsel %vm113, %v133, 0.0
      %v135 = vrot.slane %v134, 4
      %v136 = vadd.f32 %v134, %v135
      %v137 = vrot.slane %v136, 2
      %v138 = vadd.f32 %v136, %v137
      %v139 = vrot.slane %v138, 1
      %v140 = vadd.f32 %v138, %v139
      %v141 = vsel %vm121, %v140, 0.0
      %v142 = vadd.f32 %v141, 0.0
      %143 = vst [vmem:[#allocation7] sm:$0xff] %v123
      %s144 = scalar_lea.vmem [#allocation7], 8
      %145 = vst [vmem:[%s144] sm:$0xff] %v132
      %s146 = scalar_lea.vmem [#allocation7], 16
      %147 = vst [vmem:[%s146] sm:$0xff] %v142
    $region25: #{tpu_custom_call.1} parent=1 // pred_fallthru
      _
    // Predicated region
    $region26: #{tpu_custom_call.1} parent=1 // pred_check
      _
    $region27: #{tpu_custom_call.1} parent=1 // pred_check_branch
      %149 = sbr.rel (0) target = $region29
    $region28: #{tpu_custom_call.1} parent=1 // pred_region
      %s151 = ssub.s32 384, 384
      %152 = vsyncadd [#allocation4], %s151
      %s153 = sshll.u32 [#allocation7], 4
      %s154 = int_to_ptr.vmem [resolvable:$true] %s153
      %159 = dma.vmem_to_hbm [thread:$0]  %s154, 384, %s2, [#allocation4], 128, 128, 8
    $region29: #{tpu_custom_call.1} parent=1 // pred_fallthru
      _
    // Predicated region
    $region30: #{tpu_custom_call.1} parent=1 // pred_check
      _
    $region31: #{tpu_custom_call.1} parent=1 // pred_check_branch
      %161 = sbr.rel (0) target = $region33
    $region32: #{tpu_custom_call.1} parent=1 // pred_region
      %162 = dma.done [#allocation4], 384
    $region33: #{tpu_custom_call.1} parent=1 // pred_fallthru
      _
    %163 = vsyncpa [#allocation3], 1
    %164 = vsyncpa [#allocation6], 1
    %165 = vsyncpa [#allocation4], 1

</llo_original>
